<compile_context>
chip_gen: v5e
topology: v5e:2x2
jax: 0.10.0
libtpu: 0.0.40
codegen_flags: <defaults>
</compile_context>

<pallas_src>
import jax
import jax.numpy as jnp
from jax.experimental import pallas as pl
from jax.experimental.pallas import tpu as pltpu


def _round_up(x, m):
    return ((x + m - 1) // m) * m


def _largest_divisor(n, mult, cap):
    """Largest multiple of `mult` that divides n and is <= cap (requires mult | n)."""
    t = max(mult, (min(cap, n) // mult) * mult)
    while n % t:
        t -= mult
    return t


# ---------------------------------------------------------------------------
# Pass 1: per-row scores  s = abs(max(x, axis=-1))  ==  abs(topk(x, 1).values)
# ---------------------------------------------------------------------------
def _score_kernel(x_ref, s_ref):
    x = x_ref[...]                                    # (TN, C), native dtype
    m = jnp.max(x, axis=-1, keepdims=True)            # (TN, 1)
    s_ref[...] = jnp.abs(m).astype(jnp.float32)       # cast only the tiny result


# ---------------------------------------------------------------------------
# Pass 2: signed pairwise sum, per-row partials, j-reduction on VPU/XLU only
# ---------------------------------------------------------------------------
def _pairwise_kernel(si_ref, pos_ref, sj_ref, neg_ref, o_ref, acc_ref):
    j = pl.program_id(1)

    @pl.when(j == 0)
    def _init():
        acc_ref[...] = jnp.zeros_like(acc_ref)

    si = si_ref[...]                                   # (TI, 1) f32
    sj = sj_ref[...]                                   # (1, TJ) f32, lane-dense
    neg = neg_ref[...]                                 # (1, TJ) f32

    signed = jnp.sign(si - sj)                         # (TI, TJ): +1 / 0 / -1 (VPU)
    # acc[a] += sum_b sign(si[a]-sj[b]) * neg[b]   (XLU lane reduce, no MXU)
    acc_ref[...] += jnp.sum(signed * neg, axis=1, keepdims=True)

    @pl.when(j == pl.num_programs(1) - 1)
    def _flush():
        o_ref[...] = pos_ref[...] * acc_ref[...]       # per-i-tile partial rows


def auc_loss(inputs, target, *, row_tile=1024, pair_tile_i=256, pair_tile_j=2048):
    """Pallas implementation of AUCLoss.forward.

    inputs: (..., C) model scores (any float dtype, passed untouched)
    target: binary labels, flattened to length N = prod(inputs.shape[:-1])
    returns: scalar float32 AUC
    """
    x2 = inputs.reshape(-1, inputs.shape[-1])
    n, c = x2.shape

    # ---- pass-2 tiles + padding (TI mult of 8, TJ mult of 128, TI | TJ | n_pad)
    tj = min(_round_up(max(pair_tile_j, 128), 128), _round_up(n, 128))
    ti = _largest_divisor(tj, 8, max(pair_tile_i, 8))
    n_pad = _round_up(n, tj)

    if n_pad > n:
        # Padded rows get score 0 and zero pos/neg masks -> contribute nothing.
        x2 = jnp.pad(x2, ((0, n_pad - n), (0, 0)))

    # ---- masks / class counts precomputed in the wrapper ---------------------
    t = target.reshape(-1).astype(jnp.float32)
    pos = (t > 0.5).astype(jnp.float32)
    neg = 1.0 - pos
    npos = jnp.sum(pos)
    nneg = jnp.sum(neg)
    if n_pad > n:
        pos = jnp.pad(pos, (0, n_pad - n))
        neg = jnp.pad(neg, (0, n_pad - n))
    pos_col = pos.reshape(n_pad, 1)
    neg_row = neg.reshape(1, n_pad)

    # ---- pass 1: scores -------------------------------------------------------
    # VMEM budget: double-buffered (tn, c) input block <= ~1/4 of 32 MiB scoped.
    itemsize = jnp.dtype(x2.dtype).itemsize
    tn_cap = max(8, (8 * 1024 * 1024) // (2 * c * itemsize))
    # TODO(synk): for extremely wide C, add an inner "arbitrary" grid axis over C
    # with a running-max scratch instead of shrinking tn below 8.
    tn = _largest_divisor(n_pad, 8, min(row_tile, tn_cap))

    scores_col = pl.pallas_call(
        _score_kernel,
        out_shape=jax.ShapeDtypeStruct((n_pad, 1), jnp.float32),
        grid_spec=pltpu.PrefetchScalarGridSpec(
            num_scalar_prefetch=0,
            grid=(n_pad // tn,),
            in_specs=[pl.BlockSpec((tn, c), lambda r: (r, 0))],
            out_specs=pl.BlockSpec((tn, 1), lambda r: (r, 0)),
        ),
        compiler_params=pltpu.CompilerParams(dimension_semantics=("parallel",)),
    )(x2)
    # Free bitcast: (n_pad, 1) and (1, n_pad) share the same linear layout, so the
    # j-side operand of pass 2 is lane-dense without any extra kernel/transpose.
    scores_row = scores_col.reshape(1, n_pad)

    # ---- pass 2: tiled signed pair sums ---------------------------------------
    partials = pl.pallas_call(
        _pairwise_kernel,
        out_shape=jax.ShapeDtypeStruct((n_pad, 1), jnp.float32),
        grid_spec=pltpu.PrefetchScalarGridSpec(
            num_scalar_prefetch=0,
            grid=(n_pad // ti, n_pad // tj),
            in_specs=[
                pl.BlockSpec((ti, 1), lambda i, j: (i, 0)),   # s_i   (column)
                pl.BlockSpec((ti, 1), lambda i, j: (i, 0)),   # pos_i (column)
                pl.BlockSpec((1, tj), lambda i, j: (0, j)),   # s_j   (row, lane-dense)
                pl.BlockSpec((1, tj), lambda i, j: (0, j)),   # neg_j (row, lane-dense)
            ],
            out_specs=pl.BlockSpec((ti, 1), lambda i, j: (i, 0)),
            scratch_shapes=[pltpu.VMEM((ti, 1), jnp.float32)],
        ),
        # i axis carries independent per-row partials -> megacore "parallel" on
        # v7x; j is the accumulation axis -> "arbitrary".
        compiler_params=pltpu.CompilerParams(
            dimension_semantics=("parallel", "arbitrary")),
    )(scores_col, pos_col, scores_row, neg_row)

    s_sum = jnp.sum(partials)
    # NOTE: single-class targets (npos * nneg == 0) yield inf/nan; sklearn raises.
    return (0.5 + 0.5 * s_sum / (npos * nneg)).astype(jnp.float32)


def _auc_reference(inputs, target):
    # Plain-JAX reference of the same Mann-Whitney U formulation (sanity check).
    x = inputs.reshape(-1, inputs.shape[-1]).astype(jnp.float32)
    s = jnp.abs(jnp.max(x, axis=-1))
    t = target.reshape(-1).astype(jnp.float32)
    pos = (t > 0.5).astype(jnp.float32)
    neg = 1.0 - pos
    gt = (s[:, None] > s[None, :]).astype(jnp.float32)
    eq = (s[:, None] == s[None, :]).astype(jnp.float32)
    num = jnp.sum(pos[:, None] * neg[None, :] * (gt + 0.5 * eq))
    return num / (jnp.sum(pos) * jnp.sum(neg))


if __name__ == "__main__":
    key = jax.random.PRNGKey(0)
    kx, kt, kx2, kt2 = jax.random.split(key, 4)

    # Case 1: small tiles so both grids have multiple steps (pass-1 grid (4,),
    # pass-2 grid (8, 4)) and the accumulation / flush paths are exercised.
    N, C = 512, 8
    x = jax.random.normal(kx, (N, C), dtype=jnp.float32)
    tgt = (jax.random.uniform(kt, (N,)) > 0.5).astype(jnp.float32)
    tgt = tgt.at[0].set(0.0).at[1].set(1.0)          # ensure both classes present
    auc = jax.block_until_ready(
        auc_loss(x, tgt, row_tile=128, pair_tile_i=64, pair_tile_j=128))
    ref = jax.block_until_ready(_auc_reference(x, tgt))
    assert jnp.allclose(auc, ref, atol=1e-5), (auc, ref)

    # Case 2: ragged N (not a multiple of 8/128) to exercise the padding path.
    N2, C2 = 200, 5
    x2 = jax.random.normal(kx2, (N2, C2), dtype=jnp.float32)
    tgt2 = (jax.random.uniform(kt2, (N2,)) > 0.5).astype(jnp.float32)
    tgt2 = tgt2.at[0].set(0.0).at[1].set(1.0)
    auc2 = jax.block_until_ready(auc_loss(x2, tgt2))
    ref2 = jax.block_until_ready(_auc_reference(x2, tgt2))
    assert jnp.allclose(auc2, ref2, atol=1e-5), (auc2, ref2)

    print("KERNEL_OK")
</pallas_src>

<mosaic_0001>
module attributes {stable_mosaic.version = 11 : i64} {
  func.func @_score_kernel(%arg0: i32, %arg1: memref<128x8xf32, #tpu.memory_space<vmem>>, %arg2: memref<128x1xf32, #tpu.memory_space<vmem>>) attributes {dimension_semantics = [#tpu.dimension_semantics<parallel>], iteration_bounds = array<i64: 4>, scalar_prefetch = 0 : i64, scratch_operands = 0 : i64, tpu.core_type = #tpu.core_type<tc>, window_params = [{transform_indices = @transform_0, window_bounds = array<i64: 128, 8>}, {transform_indices = @transform_1, window_bounds = array<i64: 128, 1>}]} {
    %c0 = arith.constant 0 : index
    %c0_0 = arith.constant 0 : index
    %0 = vector.load %arg1[%c0, %c0_0] : memref<128x8xf32, #tpu.memory_space<vmem>>, vector<128x8xf32>
    %cst = arith.constant dense<0xFF800000> : vector<128xf32>
    %1 = vector.multi_reduction <maximumf>, %0, %cst [1] : vector<128x8xf32> to vector<128xf32>
    %2 = vector.shape_cast %1 : vector<128xf32> to vector<128x1xf32>
    %3 = math.absf %2 : vector<128x1xf32>
    %c0_1 = arith.constant 0 : index
    %c0_2 = arith.constant 0 : index
    %4 = vector.load %arg2[%c0_1, %c0_2] : memref<128x1xf32, #tpu.memory_space<vmem>>, vector<128x1xf32>
    tpu.vector_store %arg2[%c0_1, %c0_2], %3 {strides = array<i32>} : memref<128x1xf32, #tpu.memory_space<vmem>>, vector<128x1xf32>,
    return
  }
  func.func @transform_0(%arg0: i32) -> (i32, i32) {
    %c0_i32 = arith.constant 0 : i32
    %c0_i32_0 = arith.constant 0 : i32
    return %arg0, %c0_i32 : i32, i32
  }
  func.func @transform_1(%arg0: i32) -> (i32, i32) {
    %c0_i32 = arith.constant 0 : i32
    %c0_i32_0 = arith.constant 0 : i32
    return %arg0, %c0_i32 : i32, i32
  }
}

</mosaic_0001>

<llo_original>
// kernel: tpu_custom_call.1
$region0: #{tpu_custom_call.1}
  #allocation0 [shape = 'u32[]', space=smem, size = 0x4, offset = 0x4, fixed_abs, tag = 'smem constant byte address 0x4 - core index']
  #allocation1 [shape = 'u32[72,128]{1,0:T(1,128)}', space=vmem, size = 0x9000, scoped, tag = 'internal scratch']
  %s0 = inlined_call_operand.vmem [shape: f32[512,8], index: 0, kind: input, shape index: {}]
  %s1 = inlined_call_operand.vmem [shape: f32[512,1], index: 1, kind: output, shape index: {}]
  %s2 = sld [smem:[#allocation0]]
  $region37: #{tpu_custom_call.1} parent=0
    _
  %s4 = ssub.s32 1, %s2
  %s5 = scalar_select 0, %s4, %s2
  loop: start=0, step=1, limit=6
  $region2: #{tpu_custom_call.1} parent=0 // loop_pre_header
    _
  $region3: #{tpu_custom_call.1} parent=0 // loop_header
    %s7 = sphi 0, %s11
    %p8 = scmp.ge.s32.totalorder %s7, 6
    %s17 = sphi 0, %s19
    %s20 = sphi 0, %s17
    %s21 = sphi 0, %s20
    %s37 = sphi 0, %s21
    %s43 = sphi 0, %s45
    %s46 = sphi 0, %s43
    %s47 = sphi 0, %s46
    %s63 = sphi 0, %s47
  $region4: #{tpu_custom_call.1} parent=0 // loop_header_branch
    %10 = sbr.rel (%p8) target = $region8
  $region5: #{tpu_custom_call.1} parent=0 // loop_body
    %s12 = ssub.s32 %s7, 1
    %s13 = ssub.s32 %s7, 2
    %s14 = sadd.s32 %s7, 1
    %s15 = ssub.s32 %s7, %s14
    %p16 = scmp.eq.s32.totalorder %s15, 0
    %s18 = sadd.s32 %s17, 1
    %s19 = scalar_select %p16, %s17, %s18
    %p22 = pneg %p16
    %p23 = scmp.eq.s32.totalorder %s7, 3
    %p24 = por %p22, %p23
    %p25 = scmp.ne.s32.totalorder %s17, %s20
    %p26 = scmp.eq.s32.totalorder %s7, 0
    %p27 = por %p25, %p26
    %p28 = scmp.ne.s32.totalorder %s17, %s20
    %p29 = scmp.eq.s32.totalorder %s12, 3
    %p30 = por %p28, %p29
    %p31 = scmp.ne.s32.totalorder %s20, %s21
    %p32 = scmp.eq.s32.totalorder %s12, 0
    %p33 = por %p31, %p32
    %p34 = scmp.ne.s32.totalorder %s20, %s21
    %p35 = scmp.eq.s32.totalorder %s13, 3
    %p36 = por %p34, %p35
    %p38 = scmp.ne.s32.totalorder %s21, %s37
    %p39 = scmp.eq.s32.totalorder %s13, 0
    %p40 = por %p38, %p39
    %s41 = ssub.s32 %s7, %s14
    %p42 = scmp.eq.s32.totalorder %s41, 0
    %s44 = sadd.s32 %s43, 1
    %s45 = scalar_select %p42, %s43, %s44
    %p48 = pneg %p42
    %p49 = scmp.eq.s32.totalorder %s7, 3
    %p50 = por %p48, %p49
    %p51 = scmp.ne.s32.totalorder %s43, %s46
    %p52 = scmp.eq.s32.totalorder %s7, 0
    %p53 = por %p51, %p52
    %p54 = scmp.ne.s32.totalorder %s43, %s46
    %p55 = scmp.eq.s32.totalorder %s12, 3
    %p56 = por %p54, %p55
    %p57 = scmp.ne.s32.totalorder %s46, %s47
    %p58 = scmp.eq.s32.totalorder %s12, 0
    %p59 = por %p57, %p58
    %p60 = scmp.ne.s32.totalorder %s46, %s47
    %p61 = scmp.eq.s32.totalorder %s13, 3
    %p62 = por %p60, %p61
    %p64 = scmp.ne.s32.totalorder %s47, %s63
    %p65 = scmp.eq.s32.totalorder %s13, 0
    %p66 = por %p64, %p65
    %p67 = scmp.le.s32.totalorder 1, %s7
    %p68 = scmp.lt.s32.totalorder %s7, 5
    %p69 = pnand %p67, %p68
    %p70 = pneg %p69
    // Predicated region
    $region9: #{tpu_custom_call.1} parent=5 // pred_check
      _
    $region10: #{tpu_custom_call.1} parent=5 // pred_check_branch
      %72 = sbr.rel (%p69) target = $region12
    $region11: #{tpu_custom_call.1} parent=5 // pred_region
      %s73 = ssub.s32 %s7, 1
    $region12: #{tpu_custom_call.1} parent=5 // pred_fallthru
      _
    %p74 = scmp.lt.s32.totalorder %s7, 4
    // Predicated region
    $region13: #{tpu_custom_call.1} parent=5 // pred_check
      %p75 = pneg %p74
    $region14: #{tpu_custom_call.1} parent=5 // pred_check_branch
      %77 = sbr.rel (%p75) target = $region16
    $region15: #{tpu_custom_call.1} parent=5 // pred_region
      // Predicated region
      $region17: #{tpu_custom_call.1} parent=15 // pred_check
        %p78 = pneg %p27
      $region18: #{tpu_custom_call.1} parent=15 // pred_check_branch
        %80 = sbr.rel (%p78) target = $region20
      $region19: #{tpu_custom_call.1} parent=15 // pred_region
        %s81 = smul.u32 16, %s7
        %p82 = scmp.lt.s32.totalorder %s81, 63
        %s83 = scalar_select %p82, %s81, 63
        %s84 = smul.addr %s83, 8
        %s85 = scalar_lea.vmem %s0, %s84
        %s86 = smul.u32 16, %s7
      $region20: #{tpu_custom_call.1} parent=15 // pred_fallthru
        _
    $region16: #{tpu_custom_call.1} parent=5 // pred_fallthru
      _
    %p87 = scmp.le.s32.totalorder 1, %s7
    %p88 = scmp.lt.s32.totalorder %s7, 5
    %p89 = pnand %p87, %p88
    %p90 = pneg %p89
    // Predicated region
    $region21: #{tpu_custom_call.1} parent=5 // pred_check
      _
    $region22: #{tpu_custom_call.1} parent=5 // pred_check_branch
      %92 = sbr.rel (%p89) target = $region24
    $region23: #{tpu_custom_call.1} parent=5 // pred_region
      %s93 = ssub.s32 %s7, 1
      %s94 = smul.u32 16, %s12
      %p95 = scmp.lt.s32.totalorder %s94, 63
      %s96 = scalar_select %p95, %s94, 63
      %s97 = smul.addr %s96, 8
      %s98 = scalar_lea.vmem %s0, %s97
      %p99 = pneg %p33
      %p100 = pneg %p30
      %p101 = pneg %p59
      %p102 = pneg %p56
      %s103 = smul.u32 16, %s12
      %p104 = scmp.lt.s32.totalorder %s103, 63
      %s105 = scalar_select %p104, %s103, 63
      %s106 = smul.addr %s105, 8
      %s107 = scalar_lea.vmem %s1, %s106
      %s108 = smul.u32 16, %s12
      %p109 = scmp.lt.s32.totalorder %s108, 63
      %s110 = scalar_select %p109, %s108, 63
      %s111 = smul.addr %s110, 8
      %s112 = scalar_lea.vmem %s0, %s111
      %s113 = smul.u32 16, %s12
      %s114 = smul.u32 16, %s12
      %p115 = scmp.lt.s32.totalorder %s114, 63
      %s116 = scalar_select %p115, %s114, 63
      %s117 = smul.addr %s116, 8
      %s118 = scalar_lea.vmem %s1, %s117
      %s119 = smul.u32 16, %s12
      %v120 = vld [vmem:[%s112] sm:$0xff]
      %v121 = vld [vmem:[%s112 + $0x8] sm:$0xff]
      %v122 = vld [vmem:[%s112 + $0x10] sm:$0xff]
      %v123 = vld [vmem:[%s112 + $0x18] sm:$0xff]
      %v124 = vld [vmem:[%s112 + $0x20] sm:$0xff]
      %v125 = vld [vmem:[%s112 + $0x28] sm:$0xff]
      %v126 = vld [vmem:[%s112 + $0x30] sm:$0xff]
      %v127 = vld [vmem:[%s112 + $0x38] sm:$0xff]
      %v128 = vld [vmem:[%s112 + $0x40] sm:$0xff]
      %v129 = vld [vmem:[%s112 + $0x48] sm:$0xff]
      %v130 = vld [vmem:[%s112 + $0x50] sm:$0xff]
      %v131 = vld [vmem:[%s112 + $0x58] sm:$0xff]
      %v132 = vld [vmem:[%s112 + $0x60] sm:$0xff]
      %v133 = vld [vmem:[%s112 + $0x68] sm:$0xff]
      %v134 = vld [vmem:[%s112 + $0x70] sm:$0xff]
      %v135 = vld [vmem:[%s112 + $0x78] sm:$0xff]
      %vm136 = vcmask 64512
      %v137 = vsel %vm136, %v120, -inf
      %138 = vmax.xlane.f32.xlu0 %v137
      %v139 = vpop.xlane.xlu0 %138
      %v140 = vsel %vm136, %v121, -inf
      %141 = vmax.xlane.f32.xlu0 %v140
      %v142 = vpop.xlane.xlu0 %141
      %v143 = vsel %vm136, %v122, -inf
      %144 = vmax.xlane.f32.xlu0 %v143
      %v145 = vpop.xlane.xlu0 %144
      %v146 = vsel %vm136, %v123, -inf
      %147 = vmax.xlane.f32.xlu0 %v146
      %v148 = vpop.xlane.xlu0 %147
      %v149 = vsel %vm136, %v124, -inf
      %150 = vmax.xlane.f32.xlu0 %v149
      %v151 = vpop.xlane.xlu0 %150
      %v152 = vsel %vm136, %v125, -inf
      %153 = vmax.xlane.f32.xlu0 %v152
      %v154 = vpop.xlane.xlu0 %153
      %v155 = vsel %vm136, %v126, -inf
      %156 = vmax.xlane.f32.xlu0 %v155
      %v157 = vpop.xlane.xlu0 %156
      %v158 = vsel %vm136, %v127, -inf
      %159 = vmax.xlane.f32.xlu0 %v158
      %v160 = vpop.xlane.xlu0 %159
      %v161 = vsel %vm136, %v128, -inf
      %162 = vmax.xlane.f32.xlu0 %v161
      %v163 = vpop.xlane.xlu0 %162
      %v164 = vsel %vm136, %v129, -inf
      %165 = vmax.xlane.f32.xlu0 %v164
      %v166 = vpop.xlane.xlu0 %165
      %v167 = vsel %vm136, %v130, -inf
      %168 = vmax.xlane.f32.xlu0 %v167
      %v169 = vpop.xlane.xlu0 %168
      %v170 = vsel %vm136, %v131, -inf
      %171 = vmax.xlane.f32.xlu0 %v170
      %v172 = vpop.xlane.xlu0 %171
      %v173 = vsel %vm136, %v132, -inf
      %174 = vmax.xlane.f32.xlu0 %v173
      %v175 = vpop.xlane.xlu0 %174
      %v176 = vsel %vm136, %v133, -inf
      %177 = vmax.xlane.f32.xlu0 %v176
      %v178 = vpop.xlane.xlu0 %177
      %v179 = vsel %vm136, %v134, -inf
      %180 = vmax.xlane.f32.xlu0 %v179
      %v181 = vpop.xlane.xlu0 %180
      %v182 = vsel %vm136, %v135, -inf
      %183 = vmax.xlane.f32.xlu0 %v182
      %v184 = vpop.xlane.xlu0 %183
      %v185 = vand.u32 2147483647, %v139
      %v186 = vand.u32 2147483647, %v142
      %v187 = vand.u32 2147483647, %v145
      %v188 = vand.u32 2147483647, %v148
      %v189 = vand.u32 2147483647, %v151
      %v190 = vand.u32 2147483647, %v154
      %v191 = vand.u32 2147483647, %v157
      %v192 = vand.u32 2147483647, %v160
      %v193 = vand.u32 2147483647, %v163
      %v194 = vand.u32 2147483647, %v166
      %v195 = vand.u32 2147483647, %v169
      %v196 = vand.u32 2147483647, %v172
      %v197 = vand.u32 2147483647, %v175
      %v198 = vand.u32 2147483647, %v178
      %v199 = vand.u32 2147483647, %v181
      %v200 = vand.u32 2147483647, %v184
      %vm201 = vcmask 7168
      %202 = vst.msk [vmem:[%s118] sm:$0xff] %vm201, %v185
      %203 = vst.msk [vmem:[%s118 + $0x8] sm:$0xff] %vm201, %v186
      %204 = vst.msk [vmem:[%s118 + $0x10] sm:$0xff] %vm201, %v187
      %205 = vst.msk [vmem:[%s118 + $0x18] sm:$0xff] %vm201, %v188
      %206 = vst.msk [vmem:[%s118 + $0x20] sm:$0xff] %vm201, %v189
      %207 = vst.msk [vmem:[%s118 + $0x28] sm:$0xff] %vm201, %v190
      %208 = vst.msk [vmem:[%s118 + $0x30] sm:$0xff] %vm201, %v191
      %209 = vst.msk [vmem:[%s118 + $0x38] sm:$0xff] %vm201, %v192
      %210 = vst.msk [vmem:[%s118 + $0x40] sm:$0xff] %vm201, %v193
      %211 = vst.msk [vmem:[%s118 + $0x48] sm:$0xff] %vm201, %v194
      %212 = vst.msk [vmem:[%s118 + $0x50] sm:$0xff] %vm201, %v195
      %213 = vst.msk [vmem:[%s118 + $0x58] sm:$0xff] %vm201, %v196
      %214 = vst.msk [vmem:[%s118 + $0x60] sm:$0xff] %vm201, %v197
      %215 = vst.msk [vmem:[%s118 + $0x68] sm:$0xff] %vm201, %v198
      %216 = vst.msk [vmem:[%s118 + $0x70] sm:$0xff] %vm201, %v199
      %217 = vst.msk [vmem:[%s118 + $0x78] sm:$0xff] %vm201, %v200
      %s218 = smul.u32 16, %s12
      %p219 = scmp.lt.s32.totalorder %s218, 63
      %s220 = scalar_select %p219, %s218, 63
      %s221 = smul.addr %s220, 8
      %s222 = scalar_lea.vmem %s1, %s221
      // Predicated region
      $region25: #{tpu_custom_call.1} parent=23 // pred_check
        %p223 = pneg %p56
      $region26: #{tpu_custom_call.1} parent=23 // pred_check_branch
        %225 = sbr.rel (%p223) target = $region28
      $region27: #{tpu_custom_call.1} parent=23 // pred_region
        %s226 = smul.u32 16, %s12
      $region28: #{tpu_custom_call.1} parent=23 // pred_fallthru
        _
    $region24: #{tpu_custom_call.1} parent=5 // pred_fallthru
      _
    %p227 = scmp.le.s32.totalorder 2, %s7
    // Predicated region
    $region29: #{tpu_custom_call.1} parent=5 // pred_check
      %p228 = pneg %p227
    $region30: #{tpu_custom_call.1} parent=5 // pred_check_branch
      %230 = sbr.rel (%p228) target = $region32
    $region31: #{tpu_custom_call.1} parent=5 // pred_region
      %s231 = ssub.s32 %s7, 2
      // Predicated region
      $region33: #{tpu_custom_call.1} parent=31 // pred_check
        %p232 = pneg %p62
      $region34: #{tpu_custom_call.1} parent=31 // pred_check_branch
        %234 = sbr.rel (%p232) target = $region36
      $region35: #{tpu_custom_call.1} parent=31 // pred_region
        %s235 = smul.u32 16, %s13
        %p236 = scmp.lt.s32.totalorder %s235, 63
        %s237 = scalar_select %p236, %s235, 63
        %s238 = smul.addr %s237, 8
        %s239 = scalar_lea.vmem %s1, %s238
      $region36: #{tpu_custom_call.1} parent=31 // pred_fallthru
        _
    $region32: #{tpu_custom_call.1} parent=5 // pred_fallthru
      _
  $region6: #{tpu_custom_call.1} parent=0 // loop_footer
    %s11 = sadd.s32 1, %s7
  $region7: #{tpu_custom_call.1} parent=0 // loop_footer_branch
    %6 = sbr.rel target = $region3
  $region8: #{tpu_custom_call.1} parent=0 // loop_exit
    _

</llo_original>
